<compile_context>
chip_gen: v6e
topology: v6e:2x2x1
jax: 0.10.0
libtpu: 0.0.40
codegen_flags: <defaults>
</compile_context>

<pallas_src>
import jax
import jax.numpy as jnp
from jax.experimental import pallas as pl
from jax.experimental.pallas import tpu as pltpu


def _round_up(x, m):
    return ((x + m - 1) // m) * m


def _patch_embed_kernel(x_ref, w_ref, b_ref, o_ref):
    # x_ref: (tm, K) bf16/f32   w_ref: (K, E) bf16/f32   b_ref: (1, E) f32
    # o_ref: (tm, E) out_dtype
    acc = jnp.dot(x_ref[...], w_ref[...], preferred_element_type=jnp.float32)
    o_ref[...] = (acc + b_ref[...]).astype(o_ref.dtype)


def _vmem_bytes(tm, k, e, in_itemsize, out_itemsize):
    # double-buffered activation/output tiles + (default double-buffered)
    # resident weight/bias
    return (2 * tm * k * in_itemsize
            + 2 * k * e * in_itemsize
            + 2 * e * 4
            + 2 * tm * e * out_itemsize)


def _vmem_capacity_bytes():
    # Per-generation VMEM: 128 MiB on v5e/v6e, 64 MiB per TC on v7x.
    try:
        return int(pltpu.get_tpu_info().vmem_capacity_bytes)
    except Exception:
        return 64 * 1024 * 1024   # conservative fallback (v7x per-TC VMEM)


def xpatch_embed(x, weight, bias, patch_size=(1, 1), flatten=True,
                 tm=2048, use_bf16=True, out_dtype=None):
    """Pallas implementation of XPatchEmbed.forward (norm = Identity).

    x:      (B, C, H, W)   NCHW, as in the PyTorch module
    weight: (E, C, ph, pw) Conv2d weight
    bias:   (E,)           Conv2d bias
    returns (B, (W/pw)*(H/ph), E) if flatten else (B, H/ph, W/pw, E)
    """
    B, C, H, W = x.shape
    ph, pw = patch_size
    assert H % ph == 0 and W % pw == 0, "image size must match the patch grid"
    Gh, Gw = H // ph, W // pw
    E = weight.shape[0]
    K = C * ph * pw
    M = B * Gh * Gw
    out_dtype = x.dtype if out_dtype is None else out_dtype

    # --- patch extraction (fused reshape/transpose/cast in plain JAX) --------
    # TODO(synk): for very large K (ViT-style 3*16*16) fuse the patch
    # extraction into the kernel (index_map straight into NCHW x) to drop the
    # (M, K) HBM intermediate; for small K the (M, E) output stream dominates,
    # so this pre-transpose path is the right one.
    in_dtype = jnp.bfloat16 if use_bf16 else x.dtype
    xp = x.reshape(B, C, Gh, ph, Gw, pw)
    if flatten:
        # row order (b, gw, gh): kernel output is already
        # 'B C H W -> B W H C -> B (W H) C'.
        xp = jnp.transpose(xp, (0, 4, 2, 1, 3, 5))   # (B, Gw, Gh, C, ph, pw)
    else:
        # row order (b, gh, gw): kernel output is already 'B H W C'.
        xp = jnp.transpose(xp, (0, 2, 4, 1, 3, 5))   # (B, Gh, Gw, C, ph, pw)
    xp = xp.reshape(M, K).astype(in_dtype)
    wm = weight.reshape(E, K).T.astype(in_dtype)      # (K, E)
    bm = bias.reshape(1, E).astype(jnp.float32)       # bias add stays f32

    # Lane-dense output: pad E up to a multiple of 128 (small weight/bias only,
    # never the (M, K) activations).  No-op for the usual 128/768 embed dims.
    E_pad = _round_up(E, 128)
    if E_pad != E:
        wm = jnp.pad(wm, ((0, 0), (0, E_pad - E)))
        bm = jnp.pad(bm, ((0, 0), (0, E_pad - E)))

    # --- row-tile sizing against a per-generation VMEM budget ----------------
    in_b = jnp.dtype(in_dtype).itemsize
    out_b = jnp.dtype(out_dtype).itemsize
    vmem_cap = _vmem_capacity_bytes()
    budget = int(0.45 * vmem_cap)                     # ~28 MiB v7x, ~57 MiB v5e/v6e
    tm = int(tm)
    if tm >= M:
        tm = M                                        # one full-extent block (always legal)
    else:
        tm = max(256, (tm // 256) * 256)              # MXU / full-sublane-store alignment
        while tm > 512 and _vmem_bytes(tm, K, E_pad, in_b, out_b) > budget:
            tm = max(512, _round_up(tm // 2, 256))
    est = _vmem_bytes(tm, K, E_pad, in_b, out_b)
    vmem_limit = int(min(vmem_cap * 3 // 4,           # ~48 MiB v7x, ~96 MiB v5e/v6e
                         max(2 * est, 32 * 1024 * 1024)))

    # Partial last block along M is handled by Pallas (bounded reads, masked
    # writes); M is the independent dim, so no padding / trailing slice needed.
    grid = (pl.cdiv(M, tm),)

    out = pl.pallas_call(
        _patch_embed_kernel,
        out_shape=jax.ShapeDtypeStruct((M, E_pad), out_dtype),
        grid_spec=pltpu.PrefetchScalarGridSpec(
            num_scalar_prefetch=0,
            grid=grid,
            in_specs=[
                pl.BlockSpec((tm, K), lambda i: (i, 0)),        # patch rows
                pl.BlockSpec((K, E_pad), lambda i: (0, 0)),     # weight (resident)
                pl.BlockSpec((1, E_pad), lambda i: (0, 0)),     # bias
            ],
            out_specs=pl.BlockSpec((tm, E_pad), lambda i: (i, 0)),
        ),
        compiler_params=pltpu.CompilerParams(
            dimension_semantics=("parallel",),       # shards row tiles across TCs on v7x
            vmem_limit_bytes=vmem_limit,
        ),
    )(xp, wm, bm)

    if E_pad != E:
        out = out[:, :E]
    if flatten:
        return out.reshape(B, Gw * Gh, E)             # (B, num_patches, E)
    return out.reshape(B, Gh, Gw, E)                  # (B, H/ph, W/pw, E)


def _reference(x, weight, bias, patch_size, flatten):
    """Pure-JAX reference for XPatchEmbed.forward (norm = Identity)."""
    B, C, H, W = x.shape
    ph, pw = patch_size
    E = weight.shape[0]
    Gh, Gw = H // ph, W // pw
    xp = x.reshape(B, C, Gh, ph, Gw, pw)
    xp = jnp.transpose(xp, (0, 2, 4, 1, 3, 5)).reshape(B, Gh, Gw, C * ph * pw)
    y = jnp.einsum("bhwk,ek->bhwe", xp, weight.reshape(E, -1)) + bias
    if flatten:  # 'B C H W -> B W H C -> B (W H) C'
        return jnp.transpose(y, (0, 2, 1, 3)).reshape(B, Gw * Gh, E)
    return y     # 'B C H W -> B H W C'


if __name__ == "__main__":
    key = jax.random.PRNGKey(0)

    def _make(B, C, H, W, ph, pw, E, k):
        kx, kw, kb = jax.random.split(k, 3)
        x = jax.random.normal(kx, (B, C, H, W), dtype=jnp.float32)
        w = jax.random.normal(kw, (E, C, ph, pw), dtype=jnp.float32) * 0.02
        b = jax.random.normal(kb, (E,), dtype=jnp.float32) * 0.02
        return x, w, b

    k1, k2, k3, k4, k5 = jax.random.split(key, 5)

    # 1) 1x1 patches, f32 feed, flatten=True (small version of module defaults:
    #    img 2x16, in_chans=4, embed_dim=128).
    x, w, b = _make(2, 4, 2, 16, 1, 1, 128, k1)
    out = jax.block_until_ready(
        xpatch_embed(x, w, b, patch_size=(1, 1), flatten=True, use_bf16=False))
    ref = _reference(x, w, b, (1, 1), True)
    assert out.shape == ref.shape == (2, 16 * 2, 128)
    assert jnp.allclose(out, ref, atol=1e-4, rtol=1e-4)

    # 2) same problem, bf16 feed + bf16 output (f32 accumulation) -> looser tol.
    out_bf = jax.block_until_ready(
        xpatch_embed(x, w, b, patch_size=(1, 1), flatten=True,
                     use_bf16=True, out_dtype=jnp.bfloat16))
    assert out_bf.shape == ref.shape and out_bf.dtype == jnp.bfloat16
    assert jnp.allclose(out_bf.astype(jnp.float32), ref, atol=2e-2, rtol=5e-2)

    # 3) 2x2 patches, flatten=True (validates the patch-extraction transpose,
    #    K = 16 not a multiple of 128 -> full-dim lane block).
    x2, w2, b2 = _make(2, 4, 4, 16, 2, 2, 128, k2)
    out2 = jax.block_until_ready(
        xpatch_embed(x2, w2, b2, patch_size=(2, 2), flatten=True, use_bf16=False))
    ref2 = _reference(x2, w2, b2, (2, 2), True)
    assert out2.shape == (2, 8 * 2, 128)
    assert jnp.allclose(out2, ref2, atol=1e-4, rtol=1e-4)

    # 4) flatten=False: output written directly in (B, H/ph, W/pw, E).
    x3, w3, b3 = _make(2, 4, 4, 16, 2, 2, 128, k3)
    out3 = jax.block_until_ready(
        xpatch_embed(x3, w3, b3, patch_size=(2, 2), flatten=False, use_bf16=False))
    ref3 = _reference(x3, w3, b3, (2, 2), False)
    assert out3.shape == (2, 2, 8, 128)
    assert jnp.allclose(out3, ref3, atol=1e-4, rtol=1e-4)

    # 5) M = 300 with tm = 256: exercises the unpadded partial last block
    #    (grid = cdiv(M, tm) = 2, masked writes on the tail rows).
    x4, w4, b4 = _make(3, 4, 2, 50, 1, 1, 128, k4)
    out4 = jax.block_until_ready(
        xpatch_embed(x4, w4, b4, patch_size=(1, 1), flatten=True,
                     tm=256, use_bf16=False))
    ref4 = _reference(x4, w4, b4, (1, 1), True)
    assert out4.shape == (3, 50 * 2, 128)
    assert jnp.allclose(out4, ref4, atol=1e-4, rtol=1e-4)

    # 6) E = 96 (not a lane multiple): exercises the E-pad-to-128 + slice path.
    x5, w5, b5 = _make(2, 4, 2, 16, 1, 1, 96, k5)
    out5 = jax.block_until_ready(
        xpatch_embed(x5, w5, b5, patch_size=(1, 1), flatten=True, use_bf16=False))
    ref5 = _reference(x5, w5, b5, (1, 1), True)
    assert out5.shape == (2, 32, 96)
    assert jnp.allclose(out5, ref5, atol=1e-4, rtol=1e-4)

    print("KERNEL_OK")
</pallas_src>

<mosaic_0001>
module attributes {stable_mosaic.version = 11 : i64} {
  func.func @_patch_embed_kernel(%arg0: i32, %arg1: memref<64x4xf32, #tpu.memory_space<vmem>>, %arg2: memref<4x128xf32, #tpu.memory_space<vmem>>, %arg3: memref<1x128xf32, #tpu.memory_space<vmem>>, %arg4: memref<64x128xf32, #tpu.memory_space<vmem>>) attributes {dimension_semantics = [#tpu.dimension_semantics<parallel>], iteration_bounds = array<i64: 1>, scalar_prefetch = 0 : i64, scratch_operands = 0 : i64, tpu.core_type = #tpu.core_type<tc>, window_params = [{transform_indices = @transform_0, window_bounds = array<i64: 64, 4>}, {pipeline_mode = #tpu.pipeline_mode<synchronous>, transform_indices = @transform_1, window_bounds = array<i64: 4, 128>}, {pipeline_mode = #tpu.pipeline_mode<synchronous>, transform_indices = @transform_2, window_bounds = array<i64: 1, 128>}, {transform_indices = @transform_3, window_bounds = array<i64: 64, 128>}]} {
    %c0 = arith.constant 0 : index
    %c0_0 = arith.constant 0 : index
    %0 = vector.load %arg1[%c0, %c0_0] : memref<64x4xf32, #tpu.memory_space<vmem>>, vector<64x4xf32>
    %c0_1 = arith.constant 0 : index
    %c0_2 = arith.constant 0 : index
    %1 = vector.load %arg2[%c0_1, %c0_2] : memref<4x128xf32, #tpu.memory_space<vmem>>, vector<4x128xf32>
    %cst = arith.constant dense<0.000000e+00> : vector<64x128xf32>
    %2 = tpu.matmul %0, %1, %cst {dimension_numbers = #tpu.dot_dimension_numbers<[1], [0], [0], [1], [0, 0, 1, 1], [], []>} : vector<64x4xf32>, vector<4x128xf32>, vector<64x128xf32> -> vector<64x128xf32>
    %c0_3 = arith.constant 0 : index
    %c0_4 = arith.constant 0 : index
    %3 = vector.load %arg3[%c0_3, %c0_4] : memref<1x128xf32, #tpu.memory_space<vmem>>, vector<1x128xf32>
    %4 = vector.broadcast %3 : vector<1x128xf32> to vector<64x128xf32>
    %5 = arith.addf %2, %4 : vector<64x128xf32>
    %c0_5 = arith.constant 0 : index
    %c0_6 = arith.constant 0 : index
    %6 = vector.load %arg4[%c0_5, %c0_6] : memref<64x128xf32, #tpu.memory_space<vmem>>, vector<64x128xf32>
    tpu.vector_store %arg4[%c0_5, %c0_6], %5 {strides = array<i32>} : memref<64x128xf32, #tpu.memory_space<vmem>>, vector<64x128xf32>,
    return
  }
  func.func @transform_0(%arg0: i32) -> (i32, i32) {
    %c0_i32 = arith.constant 0 : i32
    %c0_i32_0 = arith.constant 0 : i32
    return %arg0, %c0_i32 : i32, i32
  }
  func.func @transform_1(%arg0: i32) -> (i32, i32) {
    %c0_i32 = arith.constant 0 : i32
    %c0_i32_0 = arith.constant 0 : i32
    %c0_i32_1 = arith.constant 0 : i32
    return %c0_i32, %c0_i32_0 : i32, i32
  }
  func.func @transform_2(%arg0: i32) -> (i32, i32) {
    %c0_i32 = arith.constant 0 : i32
    %c0_i32_0 = arith.constant 0 : i32
    %c0_i32_1 = arith.constant 0 : i32
    return %c0_i32, %c0_i32_0 : i32, i32
  }
  func.func @transform_3(%arg0: i32) -> (i32, i32) {
    %c0_i32 = arith.constant 0 : i32
    %c0_i32_0 = arith.constant 0 : i32
    return %arg0, %c0_i32 : i32, i32
  }
}

</mosaic_0001>

<llo_original>
// kernel: tpu_custom_call.1
$region0: #{tpu_custom_call.1}
  #allocation0 [shape = 'u32[]', space=smem, size = 0x4, offset = 0x4, fixed_abs, tag = 'smem constant byte address 0x4 - core index']
  #allocation1 [shape = 'u32[144,128]{1,0:T(1,128)}', space=vmem, size = 0x12000, scoped, tag = 'internal scratch']
  %s0 = inlined_call_operand.vmem [shape: f32[64,4], index: 0, kind: input, shape index: {}]
  %s1 = inlined_call_operand.vmem [shape: f32[4,128], index: 1, kind: input, shape index: {}]
  %s2 = inlined_call_operand.vmem [shape: f32[1,128], index: 2, kind: input, shape index: {}]
  %s3 = inlined_call_operand.hbm [shape: f32[64,128], index: 3, kind: output, shape index: {}]
  %s4 = sld [smem:[#allocation0]]
  $region22: #{tpu_custom_call.1} parent=0
    _
  %s6 = ssub.s32 1, %s4
  %s7 = scalar_select 0, %s6, %s4
  $region1: #{tpu_custom_call.1} parent=0
    #allocation2 [shape = 'u8[32768]{0}', space=vmem, size = 0x8000, scoped, tag = 'output window, operand 0, single buffered']
    #allocation3 [shape = 's32[1]{0}', space=sflag, size = 0x4, scoped, tag = 'scoped memory for tpu_custom_call.1']
    %8 = vsyncpa [#allocation3], 0
    // Predicated region
    $region2: #{tpu_custom_call.1} parent=1 // pred_check
      _
    $region3: #{tpu_custom_call.1} parent=1 // pred_check_branch
      %10 = sbr.rel (0) target = $region5
    $region4: #{tpu_custom_call.1} parent=1 // pred_region
      _
    $region5: #{tpu_custom_call.1} parent=1 // pred_fallthru
      _
    // Predicated region
    $region6: #{tpu_custom_call.1} parent=1 // pred_check
      _
    $region7: #{tpu_custom_call.1} parent=1 // pred_check_branch
      %12 = sbr.rel (0) target = $region9
    $region8: #{tpu_custom_call.1} parent=1 // pred_region
      _
    $region9: #{tpu_custom_call.1} parent=1 // pred_fallthru
      _
    // Predicated region
    $region10: #{tpu_custom_call.1} parent=1 // pred_check
      _
    $region11: #{tpu_custom_call.1} parent=1 // pred_check_branch
      %14 = sbr.rel (0) target = $region13
    $region12: #{tpu_custom_call.1} parent=1 // pred_region
      _
    $region13: #{tpu_custom_call.1} parent=1 // pred_fallthru
      _
    %v15 = vld [vmem:[%s0] sm:$0xff]
    %v16 = vld [vmem:[%s0 + $0x8] sm:$0xff]
    %v17 = vld [vmem:[%s0 + $0x10] sm:$0xff]
    %v18 = vld [vmem:[%s0 + $0x18] sm:$0xff]
    %v19 = vld [vmem:[%s0 + $0x20] sm:$0xff]
    %v20 = vld [vmem:[%s0 + $0x28] sm:$0xff]
    %v21 = vld [vmem:[%s0 + $0x30] sm:$0xff]
    %v22 = vld [vmem:[%s0 + $0x38] sm:$0xff]
    %v23 = vld [vmem:[%s1] sm:$0xf]
    %v24 = vld [vmem:[%s2] sm:$0x1]
    %v26 = vlaneseq
    %v27 = vshrl.u32 %v26, 7
    %v28 = vsub.s32 0, %v27
    %v29 = vrot.slane %v24, %v28
    %vm31 = vcmask 31744
    %v33 = vsel %vm31, %v15, 0
    %v36 = vsel %vm31, %v16, 0
    %v39 = vsel %vm31, %v17, 0
    %v42 = vsel %vm31, %v18, 0
    %v45 = vsel %vm31, %v19, 0
    %v48 = vsel %vm31, %v20, 0
    %v51 = vsel %vm31, %v21, 0
    %v54 = vsel %vm31, %v22, 0
    %vm56 = vcmask 1043456
    %v58 = vsel %vm56, %v23, 0
    %60 = vmatprep.subr.mxu0 0.0
    %61 = vmatpush1.msra.mxu0 0.0
    %62 = vmatprep.subr.mxu0 0.0
    %63 = vmatpush1.msra.mxu0 0.0
    %64 = vmatprep.subr.mxu0 0.0
    %65 = vmatpush1.msra.mxu0 0.0
    %66 = vmatprep.subr.mxu0 0.0
    %67 = vmatpush1.msra.mxu0 0.0
    %68 = vmatprep.subr.mxu0 0.0
    %69 = vmatpush1.msra.mxu0 0.0
    %70 = vmatprep.subr.mxu0 0.0
    %71 = vmatpush1.msra.mxu0 0.0
    %72 = vmatprep.subr.mxu0 0.0
    %73 = vmatpush1.msra.mxu0 0.0
    %74 = vmatprep.subr.mxu0 0.0
    %75 = vmatpush1.msra.mxu0 0.0
    %76 = vmatprep.subr.mxu0 0.0
    %77 = vmatpush1.msra.mxu0 0.0
    %78 = vmatprep.subr.mxu0 0.0
    %79 = vmatpush1.msra.mxu0 0.0
    %80 = vmatprep.subr.mxu0 0.0
    %81 = vmatpush1.msra.mxu0 0.0
    %82 = vmatprep.subr.mxu0 0.0
    %83 = vmatpush1.msra.mxu0 0.0
    %84 = vmatprep.subr.mxu0 0.0
    %85 = vmatpush1.msra.mxu0 0.0
    %86 = vmatprep.subr.mxu0 0.0
    %87 = vmatpush1.msra.mxu0 0.0
    %88 = vmatprep.subr.mxu0 0.0
    %89 = vmatpush1.msra.mxu0 0.0
    %90 = vmatprep.subr.mxu0 0.0
    %91 = vmatpush1.msra.mxu0 %v58
    %92 = vmatprep.subr.mxu0 0.0
    %93 = vmatpush2.msra.mxu0 0.0
    %94 = vmatprep.subr.mxu0 0.0
    %95 = vmatpush2.msra.mxu0 0.0
    %96 = vmatprep.subr.mxu0 0.0
    %97 = vmatpush2.msra.mxu0 0.0
    %98 = vmatprep.subr.mxu0 0.0
    %99 = vmatpush2.msra.mxu0 0.0
    %100 = vmatprep.subr.mxu0 0.0
    %101 = vmatpush2.msra.mxu0 0.0
    %102 = vmatprep.subr.mxu0 0.0
    %103 = vmatpush2.msra.mxu0 0.0
    %104 = vmatprep.subr.mxu0 0.0
    %105 = vmatpush2.msra.mxu0 0.0
    %106 = vmatprep.subr.mxu0 0.0
    %107 = vmatpush2.msra.mxu0 0.0
    %108 = vmatprep.subr.mxu0 0.0
    %109 = vmatpush2.msra.mxu0 0.0
    %110 = vmatprep.subr.mxu0 0.0
    %111 = vmatpush2.msra.mxu0 0.0
    %112 = vmatprep.subr.mxu0 0.0
    %113 = vmatpush2.msra.mxu0 0.0
    %114 = vmatprep.subr.mxu0 0.0
    %115 = vmatpush2.msra.mxu0 0.0
    %116 = vmatprep.subr.mxu0 0.0
    %117 = vmatpush2.msra.mxu0 0.0
    %118 = vmatprep.subr.mxu0 0.0
    %119 = vmatpush2.msra.mxu0 0.0
    %120 = vmatprep.subr.mxu0 0.0
    %121 = vmatpush2.msra.mxu0 0.0
    %122 = vmatprep.subr.mxu0 0.0
    %123 = vmatpush2.msra.mxu0 0.0
    %124 = vmatprep.mubr.f32.mxu0 0.0
    %125 = vmatmul.mubr.f32.gmra.mxu0 %v33
    %v126 = vpop.f32.mrf.mxu0
    %v127 = vadd.f32 %v29, %v126
    %v128 = vpop.f32.mrf.mxu0
    %129 = vmatprep.mubr.f32.mxu0 0.0
    %130 = vmatmul.mubr.f32.gmra.mxu0 %v36
    %v131 = vpop.f32.mrf.mxu0
    %v132 = vadd.f32 %v29, %v131
    %v133 = vpop.f32.mrf.mxu0
    %134 = vmatprep.mubr.f32.mxu0 0.0
    %135 = vmatmul.mubr.f32.gmra.mxu0 %v39
    %v136 = vpop.f32.mrf.mxu0
    %v137 = vadd.f32 %v29, %v136
    %v138 = vpop.f32.mrf.mxu0
    %139 = vmatprep.mubr.f32.mxu0 0.0
    %140 = vmatmul.mubr.f32.gmra.mxu0 %v42
    %v141 = vpop.f32.mrf.mxu0
    %v142 = vadd.f32 %v29, %v141
    %v143 = vpop.f32.mrf.mxu0
    %144 = vmatprep.mubr.f32.mxu0 0.0
    %145 = vmatmul.mubr.f32.gmra.mxu0 %v45
    %v146 = vpop.f32.mrf.mxu0
    %v147 = vadd.f32 %v29, %v146
    %v148 = vpop.f32.mrf.mxu0
    %149 = vmatprep.mubr.f32.mxu0 0.0
    %150 = vmatmul.mubr.f32.gmra.mxu0 %v48
    %v151 = vpop.f32.mrf.mxu0
    %v152 = vadd.f32 %v29, %v151
    %v153 = vpop.f32.mrf.mxu0
    %154 = vmatprep.mubr.f32.mxu0 0.0
    %155 = vmatmul.mubr.f32.gmra.mxu0 %v51
    %v156 = vpop.f32.mrf.mxu0
    %v157 = vadd.f32 %v29, %v156
    %v158 = vpop.f32.mrf.mxu0
    %159 = vmatprep.mubr.f32.mxu0 0.0
    %160 = vmatmul.mubr.f32.gmra.mxu0 %v54
    %v161 = vpop.f32.mrf.mxu0
    %v162 = vadd.f32 %v29, %v161
    %v163 = vpop.f32.mrf.mxu0
    %164 = vdwg.mxu0
    %165 = vst [vmem:[#allocation2] sm:$0xff] %v127
    %166 = vst [vmem:[#allocation2 + $0x8] sm:$0xff] %v132
    %167 = vst [vmem:[#allocation2 + $0x10] sm:$0xff] %v137
    %168 = vst [vmem:[#allocation2 + $0x18] sm:$0xff] %v142
    %169 = vst [vmem:[#allocation2 + $0x20] sm:$0xff] %v147
    %170 = vst [vmem:[#allocation2 + $0x28] sm:$0xff] %v152
    %171 = vst [vmem:[#allocation2 + $0x30] sm:$0xff] %v157
    %172 = vst [vmem:[#allocation2 + $0x38] sm:$0xff] %v162
    // Predicated region
    $region14: #{tpu_custom_call.1} parent=1 // pred_check
      _
    $region15: #{tpu_custom_call.1} parent=1 // pred_check_branch
      %174 = sbr.rel (0) target = $region17
    $region16: #{tpu_custom_call.1} parent=1 // pred_region
      %s176 = ssub.s32 1024, 1024
      %177 = vsyncadd [#allocation3], %s176
      %s178 = sshll.u32 [#allocation2], 4
      %s179 = int_to_ptr.vmem [resolvable:$true] %s178
      %184 = dma.vmem_to_hbm [thread:$0]  %s179, 1024, %s3, [#allocation3], 128, 128, 8
    $region17: #{tpu_custom_call.1} parent=1 // pred_fallthru
      _
    // Predicated region
    $region18: #{tpu_custom_call.1} parent=1 // pred_check
      _
    $region19: #{tpu_custom_call.1} parent=1 // pred_check_branch
      %186 = sbr.rel (0) target = $region21
    $region20: #{tpu_custom_call.1} parent=1 // pred_region
      %187 = dma.done [#allocation3], 1024
    $region21: #{tpu_custom_call.1} parent=1 // pred_fallthru
      _
    %188 = vsyncpa [#allocation3], 1

</llo_original>
